<compile_context>
chip_gen: v5e
topology: v5e:2x2
jax: 0.10.0
libtpu: 0.0.40
codegen_flags: <defaults>
</compile_context>

<pallas_src>
import math
import functools

import jax
import jax.numpy as jnp
from jax.experimental import pallas as pl
from jax.experimental.pallas import tpu as pltpu

_MIB = 1024 * 1024


# ----------------------------- kernels ------------------------------------- #

def _tile_lanes(a, reps):
    """Repeat `a` `reps` times along the last (lane) axis via log2-depth concats."""
    if reps <= 1:
        return a
    out = a
    n = 1
    while n * 2 <= reps:
        out = jnp.concatenate([out, out], axis=-1)
        n *= 2
    if n < reps:
        out = jnp.concatenate([out] + [a] * (reps - n), axis=-1)
    return out


def _pe_add_kernel(x_ref, pe_ref, o_ref, *, lane_reps):
    # 3-D path: x (St,Bt,D) + pe (St,1,D) broadcast.  2-D path: x (St,B*D) +
    # pe (St,D) replicated B times along lanes in-kernel.
    pe = _tile_lanes(pe_ref[...], lane_reps)
    o_ref[...] = (x_ref[...] + pe).astype(o_ref.dtype)


def _pe_add_dropout_kernel(seed_ref, x_ref, pe_ref, o_ref, *, p, lane_reps,
                           use_hw_prng):
    pe = _tile_lanes(pe_ref[...], lane_reps)
    y = x_ref[...] + pe
    shape = y.shape

    # One independent random stream per grid step (grid is always 2-D here).
    bid = pl.program_id(0) * pl.num_programs(1) + pl.program_id(1)

    if use_hw_prng:
        # TPU hardware PRNG: ~1 VPU op/element -> keeps the kernel HBM-bound.
        pltpu.prng_seed(seed_ref[0], bid)
        bits = pltpu.prng_random_bits(shape)
        if bits.dtype != jnp.int32:
            bits = pltpu.bitcast(bits, jnp.int32)
        thr = int(round(p * 2.0 ** 32)) - (1 << 31)          # signed threshold
        thr = max(-(1 << 31), min(thr, (1 << 31) - 1))
        keep = bits >= jnp.int32(thr)                        # P(keep) = 1 - p
    else:
        # Portable stateless integer-hash fallback (interpret mode / non-TPU).
        nelem = 1
        for d in shape:
            nelem *= int(d)
        idx = jnp.zeros(shape, dtype=jnp.uint32)
        stride = 1
        for ax in range(len(shape) - 1, -1, -1):
            idx = idx + (jax.lax.broadcasted_iota(jnp.uint32, shape, ax)
                         * jnp.uint32(stride))
            stride *= int(shape[ax])
        v = idx + bid.astype(jnp.uint32) * jnp.uint32(nelem)
        # golden-ratio seed mix avoids the lowbias32(0) == 0 fixed point
        v = v + (seed_ref[0].astype(jnp.uint32) + jnp.uint32(1)) * jnp.uint32(0x9E3779B9)
        v = (v ^ (v >> 16)) * jnp.uint32(0x7FEB352D)
        v = (v ^ (v >> 15)) * jnp.uint32(0x846CA68B)
        v = v ^ (v >> 16)
        bits24 = (v >> 8).astype(jnp.int32)
        thr24 = min(int(round(p * (1 << 24))), (1 << 24) - 1)
        keep = bits24 >= jnp.int32(thr24)

    scale = 1.0 / (1.0 - p)
    o_ref[...] = jnp.where(keep, y * scale, 0.0).astype(o_ref.dtype)


# ----------------------------- glue / wrapper ------------------------------ #

def make_pe_buffer(max_len, d_model, dtype=jnp.float32):
    """Same math as the torch __init__ (pe = sin + cos)."""
    position = jnp.arange(max_len, dtype=jnp.float32)[:, None]                 # (L, 1)
    div_term = jnp.exp(
        jnp.arange(d_model, dtype=jnp.float32) * (-math.log(10000.0) / d_model)
    )                                                                          # (D,)
    angles = position * div_term                                               # (L, D)
    return (jnp.sin(angles) + jnp.cos(angles)).astype(dtype)                   # (L, D)


def _pick_tile(full, target, quantum=1):
    """Largest divisor of `full` that is <= target and a multiple of `quantum`.
    Falls back to `full` (block dim == full array dim is always legal)."""
    full, target, quantum = int(full), int(target), max(1, int(quantum))
    if full <= target:
        return full
    if full % quantum == 0:
        t = (target // quantum) * quantum
        for _ in range(4096):                      # bounded trace-time search
            if t < quantum:
                break
            if full % t == 0:
                return t
            t -= quantum
    return full


def _hw_budget():
    """(target block bytes, vmem_limit_bytes) per TPU generation."""
    try:
        cap = int(pltpu.get_tpu_info().vmem_capacity_bytes)
    except Exception:
        cap = 64 * _MIB
    if cap >= 96 * _MIB:                 # v5e / v6e: 128 MiB physical VMEM
        return 16 * _MIB, 96 * _MIB
    return 8 * _MIB, 44 * _MIB           # v7x (64 MiB physical) / unknown


def positional_encoding(x, pe, pos=0, *, dropout_p=0.1, training=False, seed=0,
                        small_input_elems=1 << 16):
    """x: (S, B, D). pe: (max_len, D). Returns (S, B, D)."""
    S, B, D = x.shape
    pe_slice = jax.lax.dynamic_slice(pe, (pos, 0), (S, D)).astype(x.dtype)

    if training and dropout_p >= 1.0:    # degenerate torch behaviour: all zeros
        return jnp.zeros_like(x)
    apply_dropout = training and dropout_p > 0.0

    # Small-problem fast path: one fused XLA add beats kernel-launch overhead.
    if S * B * D <= small_input_elems:
        y = x + pe_slice[:, None, :]
        if apply_dropout:
            keep = jax.random.bernoulli(jax.random.PRNGKey(seed),
                                        1.0 - dropout_p, x.shape)
            y = jnp.where(keep, y * (1.0 / (1.0 - dropout_p)), 0.0)
        return y.astype(x.dtype)

    itemsize = x.dtype.itemsize
    quantum = {4: 8, 2: 16, 1: 32}.get(itemsize, 8)      # dtype-aware sublane tile
    block_bytes, vmem_limit = _hw_budget()
    use_hw_prng = jax.default_backend() == "tpu"

    if D % 128 == 0:
        # Natural (S, B, D) layout: lane axis already dense, no relayout needed.
        lane_reps = 1
        bt = _pick_tile(B, 1024, quantum)
        st = _pick_tile(S, max(1, block_bytes // max(1, bt * D * itemsize)), 1)
        grid = (S // st, B // bt)
        x_in = x
        pe_in = pe_slice[:, None, :]                               # (S, 1, D)
        x_spec = pl.BlockSpec((st, bt, D), lambda i, j: (i, j, 0))
        pe_spec = pl.BlockSpec((st, 1, D), lambda i, j: (i, 0, 0))
        out_spec = pl.BlockSpec((st, bt, D), lambda i, j: (i, j, 0))
        out_shape = jax.ShapeDtypeStruct((S, B, D), x.dtype)
    else:
        # D < 128 (typical TranAD): fold (B, D) into a dense lane axis with a
        # *free* contiguous reshape; sequence rides the sublane axis.  pe stays
        # (S, D) in HBM and is replicated across batch copies inside the kernel.
        L = B * D
        lane_reps = B
        st = _pick_tile(S, max(quantum, block_bytes // max(1, L * itemsize)), quantum)
        grid = (S // st, 1)
        x_in = x.reshape(S, L)                                     # free reshape
        pe_in = pe_slice                                           # (S, D)
        x_spec = pl.BlockSpec((st, L), lambda i, j: (i, 0))
        pe_spec = pl.BlockSpec((st, D), lambda i, j: (i, 0))
        out_spec = pl.BlockSpec((st, L), lambda i, j: (i, 0))
        out_shape = jax.ShapeDtypeStruct((S, L), x.dtype)

    cp = pltpu.CompilerParams(
        dimension_semantics=("parallel", "parallel"),
        vmem_limit_bytes=vmem_limit,
    )

    if not apply_dropout:
        kernel = functools.partial(_pe_add_kernel, lane_reps=lane_reps)
        y = pl.pallas_call(
            kernel, out_shape=out_shape, grid=grid,
            in_specs=[x_spec, pe_spec], out_specs=out_spec,
            compiler_params=cp,
        )(x_in, pe_in)
    else:
        kernel = functools.partial(_pe_add_dropout_kernel, p=float(dropout_p),
                                   lane_reps=lane_reps, use_hw_prng=use_hw_prng)
        seed_arr = jnp.asarray([seed], dtype=jnp.int32)
        y = pl.pallas_call(
            kernel, out_shape=out_shape, grid=grid,
            in_specs=[pl.BlockSpec(memory_space=pltpu.MemorySpace.SMEM),
                      x_spec, pe_spec],
            out_specs=out_spec,
            compiler_params=cp,
        )(seed_arr, x_in, pe_in)

    return y if y.shape == x.shape else y.reshape(S, B, D)


# ----------------------------- main ----------------------------------------- #

if __name__ == "__main__":
    key = jax.random.PRNGKey(0)
    k1, k2 = jax.random.split(key)

    # Small shapes consistent with the module: seq=8, batch=2, d_model=32.
    S, B, D = 8, 2, 32
    MAX_LEN = 64          # stand-in for max_len=5000 (same formula, smaller buffer)
    POS = 3
    P = 0.1

    x = jax.random.normal(k1, (S, B, D), dtype=jnp.float32)
    pe = make_pe_buffer(MAX_LEN, D)
    y_ref = x + pe[POS:POS + S][:, None, :]

    # Eval-mode Pallas path (D < 128 -> dense-lane (S, B*D) view), forced on.
    y = positional_encoding(x, pe, pos=POS, dropout_p=P, training=False,
                            small_input_elems=0)
    y = jax.block_until_ready(y)
    assert jnp.allclose(y, y_ref, atol=1e-6, rtol=1e-6), "eval-mode mismatch"

    # Train-mode Pallas path (hardware-PRNG dropout in-kernel), forced on.
    y_tr = positional_encoding(x, pe, pos=POS, dropout_p=P, training=True,
                               seed=1234, small_input_elems=0)
    y_tr = jax.block_until_ready(y_tr)
    mask = y_tr != 0.0
    expected = jnp.where(mask, y_ref * (1.0 / (1.0 - P)), 0.0)
    assert jnp.allclose(y_tr, expected, atol=1e-5, rtol=1e-5), "train-mode mismatch"

    # Natural 3-D layout path (d_model multiple of 128), eval mode, forced on.
    S2, B2, D2, POS2 = 16, 2, 128, 5
    x2 = jax.random.normal(k2, (S2, B2, D2), dtype=jnp.float32)
    pe2 = make_pe_buffer(MAX_LEN, D2)
    y2 = positional_encoding(x2, pe2, pos=POS2, dropout_p=P, training=False,
                             small_input_elems=0)
    y2 = jax.block_until_ready(y2)
    y2_ref = x2 + pe2[POS2:POS2 + S2][:, None, :]
    assert jnp.allclose(y2, y2_ref, atol=1e-6, rtol=1e-6), "3-D path mismatch"

    # Small-input fast path (default threshold -> fused XLA add).
    y_fast = positional_encoding(x, pe, pos=POS, dropout_p=P, training=False)
    y_fast = jax.block_until_ready(y_fast)
    assert jnp.allclose(y_fast, y_ref, atol=1e-6, rtol=1e-6), "fast-path mismatch"

    print("KERNEL_OK")
</pallas_src>

<mosaic_0001>
module attributes {stable_mosaic.version = 11 : i64} {
  func.func @_pe_add_kernel(%arg0: i32, %arg1: i32, %arg2: memref<8x64xf32, #tpu.memory_space<vmem>>, %arg3: memref<8x32xf32, #tpu.memory_space<vmem>>, %arg4: memref<8x64xf32, #tpu.memory_space<vmem>>) attributes {dimension_semantics = [#tpu.dimension_semantics<parallel>, #tpu.dimension_semantics<parallel>], iteration_bounds = array<i64: 1, 1>, scalar_prefetch = 0 : i64, scratch_operands = 0 : i64, tpu.core_type = #tpu.core_type<tc>, window_params = [{transform_indices = @transform_0, window_bounds = array<i64: 8, 64>}, {transform_indices = @transform_1, window_bounds = array<i64: 8, 32>}, {transform_indices = @transform_2, window_bounds = array<i64: 8, 64>}]} {
    %c0 = arith.constant 0 : index
    %c0_0 = arith.constant 0 : index
    %0 = vector.load %arg3[%c0, %c0_0] : memref<8x32xf32, #tpu.memory_space<vmem>>, vector<8x32xf32>
    %1 = tpu.concatenate %0, %0 in 1 : vector<8x32xf32>, vector<8x32xf32> -> vector<8x64xf32>
    %c0_1 = arith.constant 0 : index
    %c0_2 = arith.constant 0 : index
    %2 = vector.load %arg2[%c0_1, %c0_2] : memref<8x64xf32, #tpu.memory_space<vmem>>, vector<8x64xf32>
    %3 = arith.addf %2, %1 : vector<8x64xf32>
    %c0_3 = arith.constant 0 : index
    %c0_4 = arith.constant 0 : index
    %4 = vector.load %arg4[%c0_3, %c0_4] : memref<8x64xf32, #tpu.memory_space<vmem>>, vector<8x64xf32>
    tpu.vector_store %arg4[%c0_3, %c0_4], %3 {strides = array<i32>} : memref<8x64xf32, #tpu.memory_space<vmem>>, vector<8x64xf32>,
    return
  }
  func.func @transform_0(%arg0: i32, %arg1: i32) -> (i32, i32) {
    %c0_i32 = arith.constant 0 : i32
    %c0_i32_0 = arith.constant 0 : i32
    return %arg0, %c0_i32 : i32, i32
  }
  func.func @transform_1(%arg0: i32, %arg1: i32) -> (i32, i32) {
    %c0_i32 = arith.constant 0 : i32
    %c0_i32_0 = arith.constant 0 : i32
    return %arg0, %c0_i32 : i32, i32
  }
  func.func @transform_2(%arg0: i32, %arg1: i32) -> (i32, i32) {
    %c0_i32 = arith.constant 0 : i32
    %c0_i32_0 = arith.constant 0 : i32
    return %arg0, %c0_i32 : i32, i32
  }
}

</mosaic_0001>

<llo_original>
// kernel: tpu_custom_call.1
$region0: #{tpu_custom_call.1}
  #allocation0 [shape = 'u32[]', space=smem, size = 0x4, offset = 0x4, fixed_abs, tag = 'smem constant byte address 0x4 - core index']
  #allocation1 [shape = 'u32[72,128]{1,0:T(1,128)}', space=vmem, size = 0x9000, scoped, tag = 'internal scratch']
  %s0 = inlined_call_operand.hbm [shape: f32[8,64], index: 0, kind: input, shape index: {}]
  %s1 = inlined_call_operand.hbm [shape: f32[8,32], index: 1, kind: input, shape index: {}]
  %s2 = inlined_call_operand.hbm [shape: f32[8,64], index: 2, kind: output, shape index: {}]
  %s3 = sld [smem:[#allocation0]]
  $region26: #{tpu_custom_call.1} parent=0
    _
  %s5 = ssub.s32 1, %s3
  %s6 = scalar_select 0, %s5, %s3
  $region1: #{tpu_custom_call.1} parent=0
    #allocation2 [shape = 'u8[4096]{0}', space=vmem, size = 0x1000, scoped, tag = 'input window, operand 0, single buffered']
    #allocation3 [shape = 's32[1]{0}', space=sflag, size = 0x4, scoped, tag = 'scoped memory for tpu_custom_call.1']
    #allocation4 [shape = 's32[1]{0}', space=sflag, size = 0x4, scoped, tag = 'scoped memory for tpu_custom_call.1']
    #allocation5 [shape = 'u8[4096]{0}', space=vmem, size = 0x1000, scoped, tag = 'input window, operand 1, single buffered']
    #allocation6 [shape = 's32[1]{0}', space=sflag, size = 0x4, scoped, tag = 'scoped memory for tpu_custom_call.1']
    #allocation7 [shape = 'u8[4096]{0}', space=vmem, size = 0x1000, scoped, tag = 'output window, operand 0, single buffered']
    %7 = vsyncpa [#allocation3], 0
    %8 = vsyncpa [#allocation6], 0
    %9 = vsyncpa [#allocation4], 0
    // Predicated region
    $region2: #{tpu_custom_call.1} parent=1 // pred_check
      _
    $region3: #{tpu_custom_call.1} parent=1 // pred_check_branch
      %11 = sbr.rel (0) target = $region5
    $region4: #{tpu_custom_call.1} parent=1 // pred_region
      %13 = vsyncadd [#allocation3], 0
      %s15 = sshll.u32 %s0, 4
      %s16 = int_to_ptr.hbm [resolvable:$true] %s15
      %s17 = sshll.u32 [#allocation2], 4
      %s18 = int_to_ptr.vmem [resolvable:$true] %s17
      %20 = dma.hbm_to_vmem [thread:$0]  %s16, 128, %s18, [#allocation3]
    $region5: #{tpu_custom_call.1} parent=1 // pred_fallthru
      _
    // Predicated region
    $region6: #{tpu_custom_call.1} parent=1 // pred_check
      _
    $region7: #{tpu_custom_call.1} parent=1 // pred_check_branch
      %22 = sbr.rel (0) target = $region9
    $region8: #{tpu_custom_call.1} parent=1 // pred_region
      %24 = vsyncadd [#allocation6], 0
      %s26 = sshll.u32 %s1, 4
      %s27 = int_to_ptr.hbm [resolvable:$true] %s26
      %s28 = sshll.u32 [#allocation5], 4
      %s29 = int_to_ptr.vmem [resolvable:$true] %s28
      %31 = dma.hbm_to_vmem [thread:$0]  %s27, 128, %s29, [#allocation6]
    $region9: #{tpu_custom_call.1} parent=1 // pred_fallthru
      _
    // Predicated region
    $region10: #{tpu_custom_call.1} parent=1 // pred_check
      _
    $region11: #{tpu_custom_call.1} parent=1 // pred_check_branch
      %33 = sbr.rel (0) target = $region13
    $region12: #{tpu_custom_call.1} parent=1 // pred_region
      %35 = dma.done [#allocation3], 128
    $region13: #{tpu_custom_call.1} parent=1 // pred_fallthru
      _
    // Predicated region
    $region14: #{tpu_custom_call.1} parent=1 // pred_check
      _
    $region15: #{tpu_custom_call.1} parent=1 // pred_check_branch
      %37 = sbr.rel (0) target = $region17
    $region16: #{tpu_custom_call.1} parent=1 // pred_region
      %39 = dma.done [#allocation6], 128
    $region17: #{tpu_custom_call.1} parent=1 // pred_fallthru
      _
    %v40 = vld [vmem:[#allocation5] sm:$0xff]
    %42 = vrot.lane.b32.xlu0 %v40, 32
    %v43 = vpop.permute.xlu0 %42
    %vm45 = vcmask 261120
    %v46 = vsel %vm45, %v40, %v43
    %v47 = vld [vmem:[#allocation2] sm:$0xff]
    %v48 = vadd.f32 %v47, %v46
    %vm49 = vcmask 523264
    %50 = vst.msk [vmem:[#allocation7] sm:$0xff] %vm49, %v48
    // Predicated region
    $region18: #{tpu_custom_call.1} parent=1 // pred_check
      _
    $region19: #{tpu_custom_call.1} parent=1 // pred_check_branch
      %52 = sbr.rel (0) target = $region21
    $region20: #{tpu_custom_call.1} parent=1 // pred_region
      %54 = vsyncadd [#allocation4], 0
      %s56 = sshll.u32 [#allocation7], 4
      %s57 = int_to_ptr.vmem [resolvable:$true] %s56
      %s58 = sshll.u32 %s2, 4
      %s59 = int_to_ptr.hbm [resolvable:$true] %s58
      %61 = dma.vmem_to_hbm [thread:$0]  %s57, 128, %s59, [#allocation4]
    $region21: #{tpu_custom_call.1} parent=1 // pred_fallthru
      _
    // Predicated region
    $region22: #{tpu_custom_call.1} parent=1 // pred_check
      _
    $region23: #{tpu_custom_call.1} parent=1 // pred_check_branch
      %63 = sbr.rel (0) target = $region25
    $region24: #{tpu_custom_call.1} parent=1 // pred_region
      %65 = dma.done [#allocation4], 128
    $region25: #{tpu_custom_call.1} parent=1 // pred_fallthru
      _
    %66 = vsyncpa [#allocation3], 1
    %67 = vsyncpa [#allocation6], 1
    %68 = vsyncpa [#allocation4], 1

</llo_original>
